<compile_context>
chip_gen: v7x
topology: tpu7x:2x2x1
jax: 0.10.0
libtpu: 0.0.40
codegen_flags: <defaults>
</compile_context>

<pallas_src>
import functools

import jax
import jax.numpy as jnp
from jax.experimental import pallas as pl
from jax.experimental.pallas import tpu as pltpu


def _round_up(x, m):
    return ((x + m - 1) // m) * m


def mlp_kernel(x_ref, w_ref, b_ref, o_ref, *, n_layers, out_rows, compute_dtype):
    """Full MLP forward for one batch tile.

    x_ref: (P, block_b)          activations, batch on the lane axis (compute_dtype)
    w_ref: (n_layers, P, P)      padded weights, torch (out, in) layout (compute_dtype)
    b_ref: (n_layers, P, 1)      padded biases (f32)
    o_ref: (out_rows, block_b)   real output rows only (f32), lane-dense store
    """
    h = x_ref[...]  # (P, block_b), already in compute_dtype
    for l in range(n_layers):  # static unroll
        # MXU: (P,P) @ (P,block_b), f32 accumulation.
        acc = jnp.dot(w_ref[l], h, preferred_element_type=jnp.float32)
        acc = acc + b_ref[l]  # (P,1) bias broadcast along lanes, f32 VPU
        if l < n_layers - 1:
            h = jnp.maximum(acc, 0.0).astype(compute_dtype)  # ReLU, repack for next matmul
        else:
            # Last layer: no ReLU; store only the real output rows (padded rows are zero).
            o_ref[...] = acc[:out_rows, :].astype(o_ref.dtype)


def prepare_mlp_params(params, compute_dtype=jnp.bfloat16):
    """Build the resident parameter slabs ONCE (hoisted out of the per-call path).

    params: list of (W, b) in torch layout, W: (out, in), b: (out,)
    Returns (w_all: (L, P, P) compute_dtype, b_all: (L, P, 1) f32).
    """
    n_layers = len(params)
    dims = [params[0][0].shape[1]] + [w.shape[0] for (w, _) in params]
    # P only needs sublane alignment (8 f32 / 16 bf16); 32 covers both and all dims here.
    P = _round_up(max(dims), 32)
    w_all = jnp.zeros((n_layers, P, P), compute_dtype)
    b_all = jnp.zeros((n_layers, P, 1), jnp.float32)
    for l, (w, b) in enumerate(params):
        o, i = w.shape
        w_all = w_all.at[l, :o, :i].set(w.astype(compute_dtype))
        b_all = b_all.at[l, :o, 0].set(b.astype(jnp.float32))
    return w_all, b_all


def multiple_layer_regressor(x, w_all, b_all, n_out, *, block_b=None):
    """x: (B, F) f32. w_all/b_all: padded slabs from prepare_mlp_params. Returns (B, n_out) f32."""
    B, F = x.shape
    n_layers, P, _ = w_all.shape
    compute_dtype = w_all.dtype
    out_rows = _round_up(max(n_out, 1), 8)

    # Batch tiling: batch is on lanes, so tiles are multiples of 128.
    B_pad = _round_up(B, 128)
    if block_b is None:
        if B_pad <= 128:
            block_b = B_pad
        else:
            # >=2 grid steps so both v7x TensorCores get work; cap at 4096 lanes so
            # v5e/v6e keep few large tiles while staying tiny vs. every VMEM budget.
            block_b = min(4096, _round_up((B_pad + 1) // 2, 128))
    block_b = _round_up(block_b, 128)  # BlockSpec divisibility on the lane axis
    B_pad = _round_up(B_pad, block_b)
    grid = (B_pad // block_b,)

    # Staged input: (P, B_pad), batch on the lane axis, already in compute_dtype.
    x_t = jnp.zeros((P, B_pad), compute_dtype).at[:F, :B].set(x.T.astype(compute_dtype))

    kernel = functools.partial(mlp_kernel, n_layers=n_layers, out_rows=out_rows,
                               compute_dtype=compute_dtype)

    out_t = pl.pallas_call(
        kernel,
        out_shape=jax.ShapeDtypeStruct((out_rows, B_pad), jnp.float32),
        grid_spec=pltpu.PrefetchScalarGridSpec(
            num_scalar_prefetch=0,
            grid=grid,
            in_specs=[
                pl.BlockSpec((P, block_b), lambda i: (0, i)),            # activations
                pl.BlockSpec((n_layers, P, P), lambda i: (0, 0, 0)),     # weight slab (resident)
                pl.BlockSpec((n_layers, P, 1), lambda i: (0, 0, 0)),     # bias slab (resident)
            ],
            out_specs=pl.BlockSpec((out_rows, block_b), lambda i: (0, i)),
        ),
        compiler_params=pltpu.CompilerParams(
            dimension_semantics=("parallel",)),
    )(x_t, w_all, b_all)

    # Strip output-row / batch padding; return (B, n_out) like torch's forward.
    return out_t[:n_out, :B].T


def init_linear(key, fan_in, fan_out):
    """Deterministic init mimicking torch.nn.Linear default (uniform +/- 1/sqrt(fan_in))."""
    kw, kb = jax.random.split(key)
    bound = 1.0 / jnp.sqrt(jnp.float32(fan_in))
    w = jax.random.uniform(kw, (fan_out, fan_in), jnp.float32, -bound, bound)  # torch (out,in)
    b = jax.random.uniform(kb, (fan_out,), jnp.float32, -bound, bound)
    return w, b


def reference_forward(x, params, compute_dtype=jnp.float32):
    """Pure-JAX reference with the same per-layer operand dtype as the kernel."""
    h = x
    n = len(params)
    for i, (w, b) in enumerate(params):
        h = jnp.dot(h.astype(compute_dtype), w.T.astype(compute_dtype),
                    preferred_element_type=jnp.float32) + b
        if i < n - 1:
            h = jnp.maximum(h, 0.0)
    return h


if __name__ == "__main__":
    # Small shapes consistent with the module: n_feature=16, n_hid1=32, n_hid2=32, n_output=8.
    n_feature, n_hid1, n_hid2, n_output = 16, 32, 32, 8
    batch = 64

    key = jax.random.PRNGKey(0)
    keys = jax.random.split(key, 9)

    layer_dims = [
        (n_feature, n_hid1),  # hidden
        (n_hid1, n_hid1),     # inner1
        (n_hid1, n_hid1),     # inner2
        (n_hid1, n_hid2),     # inner3
        (n_hid2, n_hid2),     # inner4
        (n_hid2, n_hid2),     # inner5
        (n_hid2, n_hid2),     # inner6
        (n_hid2, n_output),   # out
    ]
    params = [init_linear(keys[i], fi, fo) for i, (fi, fo) in enumerate(layer_dims)]
    x = jax.random.normal(keys[8], (batch, n_feature), jnp.float32)

    # Default path: bf16 MXU operands, f32 accumulation / elementwise.
    w_bf16, b_f32 = prepare_mlp_params(params, compute_dtype=jnp.bfloat16)
    out = jax.block_until_ready(multiple_layer_regressor(x, w_bf16, b_f32, n_output))
    assert out.shape == (batch, n_output)
    ref_bf16 = reference_forward(x, params, compute_dtype=jnp.bfloat16)
    assert jnp.allclose(out, ref_bf16, atol=2e-2, rtol=2e-2), "mismatch vs bf16 reference"

    # Strict check of the algorithm with pure-f32 matmuls.
    w_f32, b_f32b = prepare_mlp_params(params, compute_dtype=jnp.float32)
    out_f32 = jax.block_until_ready(multiple_layer_regressor(x, w_f32, b_f32b, n_output))
    ref_f32 = reference_forward(x, params, compute_dtype=jnp.float32)
    assert jnp.allclose(out_f32, ref_f32, atol=1e-4, rtol=1e-4), "mismatch vs f32 reference"

    print("KERNEL_OK")
</pallas_src>

<mosaic_0001>
module attributes {stable_mosaic.version = 11 : i64} {
  func.func @mlp_kernel(%arg0: i32, %arg1: memref<32x128xbf16, #tpu.memory_space<vmem>>, %arg2: memref<8x32x32xbf16, #tpu.memory_space<vmem>>, %arg3: memref<8x32x1xf32, #tpu.memory_space<vmem>>, %arg4: memref<8x128xf32, #tpu.memory_space<vmem>>) attributes {dimension_semantics = [#tpu.dimension_semantics<parallel>], iteration_bounds = array<i64: 1>, scalar_prefetch = 0 : i64, scratch_operands = 0 : i64, tpu.core_type = #tpu.core_type<tc>, window_params = [{transform_indices = @transform_0, window_bounds = array<i64: 32, 128>}, {pipeline_mode = #tpu.pipeline_mode<synchronous>, transform_indices = @transform_1, window_bounds = array<i64: 8, 32, 32>}, {pipeline_mode = #tpu.pipeline_mode<synchronous>, transform_indices = @transform_2, window_bounds = array<i64: 8, 32, 1>}, {transform_indices = @transform_3, window_bounds = array<i64: 8, 128>}]} {
    %c0 = arith.constant 0 : index
    %c0_0 = arith.constant 0 : index
    %0 = vector.load %arg1[%c0, %c0_0] : memref<32x128xbf16, #tpu.memory_space<vmem>>, vector<32x128xbf16>
    %c0_1 = arith.constant 0 : index
    %c0_2 = arith.constant 0 : index
    %c0_3 = arith.constant 0 : index
    %1 = vector.load %arg2[%c0_1, %c0_2, %c0_3] : memref<8x32x32xbf16, #tpu.memory_space<vmem>>, vector<1x32x32xbf16>
    %2 = vector.shape_cast %1 : vector<1x32x32xbf16> to vector<32x32xbf16>
    %cst = arith.constant dense<0.000000e+00> : vector<32x128xf32>
    %3 = tpu.matmul %2, %0, %cst {dimension_numbers = #tpu.dot_dimension_numbers<[1], [0], [0], [1], [0, 0, 1, 1], [], []>} : vector<32x32xbf16>, vector<32x128xbf16>, vector<32x128xf32> -> vector<32x128xf32>
    %c0_4 = arith.constant 0 : index
    %c0_5 = arith.constant 0 : index
    %c0_6 = arith.constant 0 : index
    %4 = vector.load %arg3[%c0_4, %c0_5, %c0_6] : memref<8x32x1xf32, #tpu.memory_space<vmem>>, vector<1x32x1xf32>
    %5 = vector.shape_cast %4 : vector<1x32x1xf32> to vector<32x1xf32>
    %6 = vector.broadcast %5 : vector<32x1xf32> to vector<32x128xf32>
    %7 = arith.addf %3, %6 : vector<32x128xf32>
    %cst_7 = arith.constant 0.000000e+00 : f32
    %8 = vector.broadcast %cst_7 : f32 to vector<32x128xf32>
    %9 = arith.maximumf %7, %8 : vector<32x128xf32>
    %10 = arith.truncf %9 : vector<32x128xf32> to vector<32x128xbf16>
    %c1 = arith.constant 1 : index
    %c0_8 = arith.constant 0 : index
    %c0_9 = arith.constant 0 : index
    %11 = vector.load %arg2[%c1, %c0_8, %c0_9] : memref<8x32x32xbf16, #tpu.memory_space<vmem>>, vector<1x32x32xbf16>
    %12 = vector.shape_cast %11 : vector<1x32x32xbf16> to vector<32x32xbf16>
    %cst_10 = arith.constant dense<0.000000e+00> : vector<32x128xf32>
    %13 = tpu.matmul %12, %10, %cst_10 {dimension_numbers = #tpu.dot_dimension_numbers<[1], [0], [0], [1], [0, 0, 1, 1], [], []>} : vector<32x32xbf16>, vector<32x128xbf16>, vector<32x128xf32> -> vector<32x128xf32>
    %c1_11 = arith.constant 1 : index
    %c0_12 = arith.constant 0 : index
    %c0_13 = arith.constant 0 : index
    %14 = vector.load %arg3[%c1_11, %c0_12, %c0_13] : memref<8x32x1xf32, #tpu.memory_space<vmem>>, vector<1x32x1xf32>
    %15 = vector.shape_cast %14 : vector<1x32x1xf32> to vector<32x1xf32>
    %16 = vector.broadcast %15 : vector<32x1xf32> to vector<32x128xf32>
    %17 = arith.addf %13, %16 : vector<32x128xf32>
    %cst_14 = arith.constant 0.000000e+00 : f32
    %18 = vector.broadcast %cst_14 : f32 to vector<32x128xf32>
    %19 = arith.maximumf %17, %18 : vector<32x128xf32>
    %20 = arith.truncf %19 : vector<32x128xf32> to vector<32x128xbf16>
    %c2 = arith.constant 2 : index
    %c0_15 = arith.constant 0 : index
    %c0_16 = arith.constant 0 : index
    %21 = vector.load %arg2[%c2, %c0_15, %c0_16] : memref<8x32x32xbf16, #tpu.memory_space<vmem>>, vector<1x32x32xbf16>
    %22 = vector.shape_cast %21 : vector<1x32x32xbf16> to vector<32x32xbf16>
    %cst_17 = arith.constant dense<0.000000e+00> : vector<32x128xf32>
    %23 = tpu.matmul %22, %20, %cst_17 {dimension_numbers = #tpu.dot_dimension_numbers<[1], [0], [0], [1], [0, 0, 1, 1], [], []>} : vector<32x32xbf16>, vector<32x128xbf16>, vector<32x128xf32> -> vector<32x128xf32>
    %c2_18 = arith.constant 2 : index
    %c0_19 = arith.constant 0 : index
    %c0_20 = arith.constant 0 : index
    %24 = vector.load %arg3[%c2_18, %c0_19, %c0_20] : memref<8x32x1xf32, #tpu.memory_space<vmem>>, vector<1x32x1xf32>
    %25 = vector.shape_cast %24 : vector<1x32x1xf32> to vector<32x1xf32>
    %26 = vector.broadcast %25 : vector<32x1xf32> to vector<32x128xf32>
    %27 = arith.addf %23, %26 : vector<32x128xf32>
    %cst_21 = arith.constant 0.000000e+00 : f32
    %28 = vector.broadcast %cst_21 : f32 to vector<32x128xf32>
    %29 = arith.maximumf %27, %28 : vector<32x128xf32>
    %30 = arith.truncf %29 : vector<32x128xf32> to vector<32x128xbf16>
    %c3 = arith.constant 3 : index
    %c0_22 = arith.constant 0 : index
    %c0_23 = arith.constant 0 : index
    %31 = vector.load %arg2[%c3, %c0_22, %c0_23] : memref<8x32x32xbf16, #tpu.memory_space<vmem>>, vector<1x32x32xbf16>
    %32 = vector.shape_cast %31 : vector<1x32x32xbf16> to vector<32x32xbf16>
    %cst_24 = arith.constant dense<0.000000e+00> : vector<32x128xf32>
    %33 = tpu.matmul %32, %30, %cst_24 {dimension_numbers = #tpu.dot_dimension_numbers<[1], [0], [0], [1], [0, 0, 1, 1], [], []>} : vector<32x32xbf16>, vector<32x128xbf16>, vector<32x128xf32> -> vector<32x128xf32>
    %c3_25 = arith.constant 3 : index
    %c0_26 = arith.constant 0 : index
    %c0_27 = arith.constant 0 : index
    %34 = vector.load %arg3[%c3_25, %c0_26, %c0_27] : memref<8x32x1xf32, #tpu.memory_space<vmem>>, vector<1x32x1xf32>
    %35 = vector.shape_cast %34 : vector<1x32x1xf32> to vector<32x1xf32>
    %36 = vector.broadcast %35 : vector<32x1xf32> to vector<32x128xf32>
    %37 = arith.addf %33, %36 : vector<32x128xf32>
    %cst_28 = arith.constant 0.000000e+00 : f32
    %38 = vector.broadcast %cst_28 : f32 to vector<32x128xf32>
    %39 = arith.maximumf %37, %38 : vector<32x128xf32>
    %40 = arith.truncf %39 : vector<32x128xf32> to vector<32x128xbf16>
    %c4 = arith.constant 4 : index
    %c0_29 = arith.constant 0 : index
    %c0_30 = arith.constant 0 : index
    %41 = vector.load %arg2[%c4, %c0_29, %c0_30] : memref<8x32x32xbf16, #tpu.memory_space<vmem>>, vector<1x32x32xbf16>
    %42 = vector.shape_cast %41 : vector<1x32x32xbf16> to vector<32x32xbf16>
    %cst_31 = arith.constant dense<0.000000e+00> : vector<32x128xf32>
    %43 = tpu.matmul %42, %40, %cst_31 {dimension_numbers = #tpu.dot_dimension_numbers<[1], [0], [0], [1], [0, 0, 1, 1], [], []>} : vector<32x32xbf16>, vector<32x128xbf16>, vector<32x128xf32> -> vector<32x128xf32>
    %c4_32 = arith.constant 4 : index
    %c0_33 = arith.constant 0 : index
    %c0_34 = arith.constant 0 : index
    %44 = vector.load %arg3[%c4_32, %c0_33, %c0_34] : memref<8x32x1xf32, #tpu.memory_space<vmem>>, vector<1x32x1xf32>
    %45 = vector.shape_cast %44 : vector<1x32x1xf32> to vector<32x1xf32>
    %46 = vector.broadcast %45 : vector<32x1xf32> to vector<32x128xf32>
    %47 = arith.addf %43, %46 : vector<32x128xf32>
    %cst_35 = arith.constant 0.000000e+00 : f32
    %48 = vector.broadcast %cst_35 : f32 to vector<32x128xf32>
    %49 = arith.maximumf %47, %48 : vector<32x128xf32>
    %50 = arith.truncf %49 : vector<32x128xf32> to vector<32x128xbf16>
    %c5 = arith.constant 5 : index
    %c0_36 = arith.constant 0 : index
    %c0_37 = arith.constant 0 : index
    %51 = vector.load %arg2[%c5, %c0_36, %c0_37] : memref<8x32x32xbf16, #tpu.memory_space<vmem>>, vector<1x32x32xbf16>
    %52 = vector.shape_cast %51 : vector<1x32x32xbf16> to vector<32x32xbf16>
    %cst_38 = arith.constant dense<0.000000e+00> : vector<32x128xf32>
    %53 = tpu.matmul %52, %50, %cst_38 {dimension_numbers = #tpu.dot_dimension_numbers<[1], [0], [0], [1], [0, 0, 1, 1], [], []>} : vector<32x32xbf16>, vector<32x128xbf16>, vector<32x128xf32> -> vector<32x128xf32>
    %c5_39 = arith.constant 5 : index
    %c0_40 = arith.constant 0 : index
    %c0_41 = arith.constant 0 : index
    %54 = vector.load %arg3[%c5_39, %c0_40, %c0_41] : memref<8x32x1xf32, #tpu.memory_space<vmem>>, vector<1x32x1xf32>
    %55 = vector.shape_cast %54 : vector<1x32x1xf32> to vector<32x1xf32>
    %56 = vector.broadcast %55 : vector<32x1xf32> to vector<32x128xf32>
    %57 = arith.addf %53, %56 : vector<32x128xf32>
    %cst_42 = arith.constant 0.000000e+00 : f32
    %58 = vector.broadcast %cst_42 : f32 to vector<32x128xf32>
    %59 = arith.maximumf %57, %58 : vector<32x128xf32>
    %60 = arith.truncf %59 : vector<32x128xf32> to vector<32x128xbf16>
    %c6 = arith.constant 6 : index
    %c0_43 = arith.constant 0 : index
    %c0_44 = arith.constant 0 : index
    %61 = vector.load %arg2[%c6, %c0_43, %c0_44] : memref<8x32x32xbf16, #tpu.memory_space<vmem>>, vector<1x32x32xbf16>
    %62 = vector.shape_cast %61 : vector<1x32x32xbf16> to vector<32x32xbf16>
    %cst_45 = arith.constant dense<0.000000e+00> : vector<32x128xf32>
    %63 = tpu.matmul %62, %60, %cst_45 {dimension_numbers = #tpu.dot_dimension_numbers<[1], [0], [0], [1], [0, 0, 1, 1], [], []>} : vector<32x32xbf16>, vector<32x128xbf16>, vector<32x128xf32> -> vector<32x128xf32>
    %c6_46 = arith.constant 6 : index
    %c0_47 = arith.constant 0 : index
    %c0_48 = arith.constant 0 : index
    %64 = vector.load %arg3[%c6_46, %c0_47, %c0_48] : memref<8x32x1xf32, #tpu.memory_space<vmem>>, vector<1x32x1xf32>
    %65 = vector.shape_cast %64 : vector<1x32x1xf32> to vector<32x1xf32>
    %66 = vector.broadcast %65 : vector<32x1xf32> to vector<32x128xf32>
    %67 = arith.addf %63, %66 : vector<32x128xf32>
    %cst_49 = arith.constant 0.000000e+00 : f32
    %68 = vector.broadcast %cst_49 : f32 to vector<32x128xf32>
    %69 = arith.maximumf %67, %68 : vector<32x128xf32>
    %70 = arith.truncf %69 : vector<32x128xf32> to vector<32x128xbf16>
    %c7 = arith.constant 7 : index
    %c0_50 = arith.constant 0 : index
    %c0_51 = arith.constant 0 : index
    %71 = vector.load %arg2[%c7, %c0_50, %c0_51] : memref<8x32x32xbf16, #tpu.memory_space<vmem>>, vector<1x32x32xbf16>
    %72 = vector.shape_cast %71 : vector<1x32x32xbf16> to vector<32x32xbf16>
    %cst_52 = arith.constant dense<0.000000e+00> : vector<32x128xf32>
    %73 = tpu.matmul %72, %70, %cst_52 {dimension_numbers = #tpu.dot_dimension_numbers<[1], [0], [0], [1], [0, 0, 1, 1], [], []>} : vector<32x32xbf16>, vector<32x128xbf16>, vector<32x128xf32> -> vector<32x128xf32>
    %c7_53 = arith.constant 7 : index
    %c0_54 = arith.constant 0 : index
    %c0_55 = arith.constant 0 : index
    %74 = vector.load %arg3[%c7_53, %c0_54, %c0_55] : memref<8x32x1xf32, #tpu.memory_space<vmem>>, vector<1x32x1xf32>
    %75 = vector.shape_cast %74 : vector<1x32x1xf32> to vector<32x1xf32>
    %76 = vector.broadcast %75 : vector<32x1xf32> to vector<32x128xf32>
    %77 = arith.addf %73, %76 : vector<32x128xf32>
    %78 = vector.extract_strided_slice %77 {offsets = [0, 0], sizes = [8, 128], strides = [1, 1]} : vector<32x128xf32> to vector<8x128xf32>
    %c0_56 = arith.constant 0 : index
    %c0_57 = arith.constant 0 : index
    %79 = vector.load %arg4[%c0_56, %c0_57] : memref<8x128xf32, #tpu.memory_space<vmem>>, vector<8x128xf32>
    tpu.vector_store %arg4[%c0_56, %c0_57], %78 {strides = array<i32>} : memref<8x128xf32, #tpu.memory_space<vmem>>, vector<8x128xf32>,
    return
  }
  func.func @transform_0(%arg0: i32) -> (i32, i32) {
    %c0_i32 = arith.constant 0 : i32
    %c0_i32_0 = arith.constant 0 : i32
    return %c0_i32, %arg0 : i32, i32
  }
  func.func @transform_1(%arg0: i32) -> (i32, i32, i32) {
    %c0_i32 = arith.constant 0 : i32
    %c0_i32_0 = arith.constant 0 : i32
    %c0_i32_1 = arith.constant 0 : i32
    %c0_i32_2 = arith.constant 0 : i32
    return %c0_i32, %c0_i32_0, %c0_i32_1 : i32, i32, i32
  }
  func.func @transform_2(%arg0: i32) -> (i32, i32, i32) {
    %c0_i32 = arith.constant 0 : i32
    %c0_i32_0 = arith.constant 0 : i32
    %c0_i32_1 = arith.constant 0 : i32
    %c0_i32_2 = arith.constant 0 : i32
    return %c0_i32, %c0_i32_0, %c0_i32_1 : i32, i32, i32
  }
  func.func @transform_3(%arg0: i32) -> (i32, i32) {
    %c0_i32 = arith.constant 0 : i32
    %c0_i32_0 = arith.constant 0 : i32
    return %c0_i32, %arg0 : i32, i32
  }
}

</mosaic_0001>

<llo_original>
// kernel: tpu_custom_call.1
$region0: #{tpu_custom_call.1}
  #allocation0 [shape = 'u32[]', space=smem, size = 0x4, offset = 0x4, fixed_abs, tag = 'smem constant byte address 0x4 - core index']
  #allocation1 [shape = 'u32[144,128]{1,0:T(1,128)}', space=vmem, size = 0x12000, scoped, tag = 'internal scratch']
  %s0 = inlined_call_operand.vmem [shape: bf16[32,128], index: 0, kind: input, shape index: {}]
  %s1 = inlined_call_operand.vmem [shape: bf16[8,32,32], index: 1, kind: input, shape index: {}]
  %s2 = inlined_call_operand.vmem [shape: f32[8,32,1], index: 2, kind: input, shape index: {}]
  %s3 = inlined_call_operand.hbm [shape: f32[8,128], index: 3, kind: output, shape index: {}]
  %s4 = sld [smem:[#allocation0]]
  $region22: #{tpu_custom_call.1} parent=0
    _
  %s6 = ssub.s32 1, %s4
  %s7 = scalar_select 0, %s6, %s4
  $region1: #{tpu_custom_call.1} parent=0
    #allocation2 [shape = 'u8[4096]{0}', space=vmem, size = 0x1000, scoped, tag = 'output window, operand 0, single buffered']
    #allocation3 [shape = 's32[1]{0}', space=sflag, size = 0x4, scoped, tag = 'scoped memory for tpu_custom_call.1']
    %8 = vsyncpa [#allocation3], 0
    // Predicated region
    $region2: #{tpu_custom_call.1} parent=1 // pred_check
      _
    $region3: #{tpu_custom_call.1} parent=1 // pred_check_branch
      %10 = sbr.rel (0) target = $region5
    $region4: #{tpu_custom_call.1} parent=1 // pred_region
      _
    $region5: #{tpu_custom_call.1} parent=1 // pred_fallthru
      _
    // Predicated region
    $region6: #{tpu_custom_call.1} parent=1 // pred_check
      _
    $region7: #{tpu_custom_call.1} parent=1 // pred_check_branch
      %12 = sbr.rel (0) target = $region9
    $region8: #{tpu_custom_call.1} parent=1 // pred_region
      _
    $region9: #{tpu_custom_call.1} parent=1 // pred_fallthru
      _
    // Predicated region
    $region10: #{tpu_custom_call.1} parent=1 // pred_check
      _
    $region11: #{tpu_custom_call.1} parent=1 // pred_check_branch
      %14 = sbr.rel (0) target = $region13
    $region12: #{tpu_custom_call.1} parent=1 // pred_region
      _
    $region13: #{tpu_custom_call.1} parent=1 // pred_fallthru
      _
    %v16 = vld [vmem:[%s0] sm:$0xf]
    %v17 = vld [vmem:[%s0 + $0x4] sm:$0xf]
    %v18 = vld [vmem:[%s0 + $0x8] sm:$0xf]
    %v19 = vld [vmem:[%s0 + $0xc] sm:$0xf]
    %v20 = vld [vmem:[%s1] sm:$0xf]
    %v21 = vld [vmem:[%s1 + $0x4] sm:$0xf]
    %v22 = vld [vmem:[%s1 + $0x8] sm:$0xf]
    %v23 = vld [vmem:[%s1 + $0xc] sm:$0xf]
    %v24 = vld [vmem:[%s2] sm:$0xff]
    %v25 = vld [vmem:[%s2 + $0x8] sm:$0xff]
    %v26 = vld [vmem:[%s2 + $0x10] sm:$0xff]
    %v27 = vld [vmem:[%s2 + $0x18] sm:$0xff]
    %29 = vset.pattern.permute.xlu0 0
    %30 = vperm.xlu0 %29, %v24
    %v31 = vpop.permute.xlu0 %30
    %34 = vset.pattern.permute.xlu0 0
    %35 = vperm.xlu0 %34, %v25
    %v36 = vpop.permute.xlu0 %35
    %39 = vset.pattern.permute.xlu0 0
    %40 = vperm.xlu0 %39, %v26
    %v41 = vpop.permute.xlu0 %40
    %44 = vset.pattern.permute.xlu0 0
    %45 = vperm.xlu0 %44, %v27
    %v46 = vpop.permute.xlu0 %45
    %v52 = vunpack.c.l.b16 %v20
    %v53 = vunpack.c.l.b16 %v21
    %v54 = vunpack.c.l.b16 %v22
    %v55 = vunpack.c.l.b16 %v23
    %v56 = vpack.c.b16 %v53, %v52
    %v57 = vpack.c.b16 %v55, %v54
    %v62 = vunpack.c.l.b16 %v16
    %v63 = vunpack.c.l.b16 %v17
    %v64 = vunpack.c.l.b16 %v18
    %v65 = vunpack.c.l.b16 %v19
    %v66 = vpack.c.b16 %v63, %v62
    %v67 = vpack.c.b16 %v65, %v64
    %vm70 = vcmask 261120
    %v72 = vsel %vm70, %v56, 0
    %v75 = vsel %vm70, %v57, 0
    %77 = vmatprep.subr.bf16.mxu0 0
    %78 = vmatpush1.bf16.msra.mxu0 %v66
    %79 = vmatprep.subr.bf16.mxu0 0
    %80 = vmatpush1.bf16.msra.mxu0 %v67
    %81 = vmatprep.subr.bf16.mxu0 0
    %82 = vmatpush1.bf16.msra.mxu0 0
    %83 = vmatprep.subr.bf16.mxu0 0
    %84 = vmatpush1.bf16.msra.mxu0 0
    %85 = vmatprep.subr.bf16.mxu0 0
    %86 = vmatpush1.bf16.msra.mxu0 0
    %87 = vmatprep.subr.bf16.mxu0 0
    %88 = vmatpush1.bf16.msra.mxu0 0
    %89 = vmatprep.subr.bf16.mxu0 0
    %90 = vmatpush1.bf16.msra.mxu0 0
    %91 = vmatprep.subr.bf16.mxu0 0
    %92 = vmatpush1.bf16.msra.mxu0 0
    %93 = vmatprep.subr.bf16.mxu0 0
    %94 = vmatpush1.bf16.msra.mxu0 0
    %95 = vmatprep.subr.bf16.mxu0 0
    %96 = vmatpush1.bf16.msra.mxu0 0
    %97 = vmatprep.subr.bf16.mxu0 0
    %98 = vmatpush1.bf16.msra.mxu0 0
    %99 = vmatprep.subr.bf16.mxu0 0
    %100 = vmatpush1.bf16.msra.mxu0 0
    %101 = vmatprep.subr.bf16.mxu0 0
    %102 = vmatpush1.bf16.msra.mxu0 0
    %103 = vmatprep.subr.bf16.mxu0 0
    %104 = vmatpush1.bf16.msra.mxu0 0
    %105 = vmatprep.subr.bf16.mxu0 0
    %106 = vmatpush1.bf16.msra.mxu0 0
    %107 = vmatprep.subr.bf16.mxu0 0
    %108 = vmatpush1.bf16.msra.mxu0 0
    %109 = vmatprep.mubr.bf16.mxu0 0
    %110 = vmatmul.mubr.bf16.gmra.mrb[0].mxu0 %v72
    %v111 = vpop.f32.mrb[0].mxu0
    %v112 = vadd.f32 %v31, %v111
    %v113 = vpop.f32.mrb[0].mxu0
    %v114 = vpop.f32.mrb[0].mxu0
    %v115 = vadd.f32 %v36, %v114
    %v116 = vpop.f32.mrb[0].mxu0
    %117 = vmatprep.mubr.bf16.mxu0 0
    %118 = vmatmul.mubr.bf16.gmra.mrb[0].mxu0 %v75
    %v119 = vpop.f32.mrb[0].mxu0
    %v120 = vadd.f32 %v41, %v119
    %v121 = vpop.f32.mrb[0].mxu0
    %v122 = vpop.f32.mrb[0].mxu0
    %v123 = vadd.f32 %v46, %v122
    %v124 = vpop.f32.mrb[0].mxu0
    %125 = vdwg.mxu0
    %v126 = vmax.f32 %v112, 0.0
    %v127 = vmax.f32 %v115, 0.0
    %v128 = vmax.f32 %v120, 0.0
    %v129 = vmax.f32 %v123, 0.0
    %v130 = vpack.c.bf16 %v127, %v126
    %v131 = vpack.c.bf16 %v129, %v128
    %s132 = scalar_lea.vmem %s1, 16
    %v133 = vld [vmem:[%s132] sm:$0xf]
    %v134 = vld [vmem:[%s132 + $0x4] sm:$0xf]
    %v135 = vld [vmem:[%s132 + $0x8] sm:$0xf]
    %v136 = vld [vmem:[%s132 + $0xc] sm:$0xf]
    %s137 = scalar_lea.vmem %s2, 32
    %v138 = vld [vmem:[%s137] sm:$0xff]
    %v139 = vld [vmem:[%s137 + $0x8] sm:$0xff]
    %v140 = vld [vmem:[%s137 + $0x10] sm:$0xff]
    %v141 = vld [vmem:[%s137 + $0x18] sm:$0xff]
    %143 = vset.pattern.permute.xlu0 0
    %144 = vperm.xlu0 %143, %v138
    %v145 = vpop.permute.xlu0 %144
    %148 = vset.pattern.permute.xlu0 0
    %149 = vperm.xlu0 %148, %v139
    %v150 = vpop.permute.xlu0 %149
    %153 = vset.pattern.permute.xlu0 0
    %154 = vperm.xlu0 %153, %v140
    %v155 = vpop.permute.xlu0 %154
    %158 = vset.pattern.permute.xlu0 0
    %159 = vperm.xlu0 %158, %v141
    %v160 = vpop.permute.xlu0 %159
    %v166 = vunpack.c.l.b16 %v133
    %v167 = vunpack.c.l.b16 %v134
    %v168 = vunpack.c.l.b16 %v135
    %v169 = vunpack.c.l.b16 %v136
    %v170 = vpack.c.b16 %v167, %v166
    %v171 = vpack.c.b16 %v169, %v168
    %v173 = vsel %vm70, %v170, 0
    %v176 = vsel %vm70, %v171, 0
    %178 = vmatprep.subr.bf16.mxu0 0
    %179 = vmatpush1.bf16.msra.mxu0 %v130
    %180 = vmatprep.subr.bf16.mxu0 0
    %181 = vmatpush1.bf16.msra.mxu0 %v131
    %182 = vmatprep.subr.bf16.mxu0 0
    %183 = vmatpush1.bf16.msra.mxu0 0
    %184 = vmatprep.subr.bf16.mxu0 0
    %185 = vmatpush1.bf16.msra.mxu0 0
    %186 = vmatprep.subr.bf16.mxu0 0
    %187 = vmatpush1.bf16.msra.mxu0 0
    %188 = vmatprep.subr.bf16.mxu0 0
    %189 = vmatpush1.bf16.msra.mxu0 0
    %190 = vmatprep.subr.bf16.mxu0 0
    %191 = vmatpush1.bf16.msra.mxu0 0
    %192 = vmatprep.subr.bf16.mxu0 0
    %193 = vmatpush1.bf16.msra.mxu0 0
    %194 = vmatprep.subr.bf16.mxu0 0
    %195 = vmatpush1.bf16.msra.mxu0 0
    %196 = vmatprep.subr.bf16.mxu0 0
    %197 = vmatpush1.bf16.msra.mxu0 0
    %198 = vmatprep.subr.bf16.mxu0 0
    %199 = vmatpush1.bf16.msra.mxu0 0
    %200 = vmatprep.subr.bf16.mxu0 0
    %201 = vmatpush1.bf16.msra.mxu0 0
    %202 = vmatprep.subr.bf16.mxu0 0
    %203 = vmatpush1.bf16.msra.mxu0 0
    %204 = vmatprep.subr.bf16.mxu0 0
    %205 = vmatpush1.bf16.msra.mxu0 0
    %206 = vmatprep.subr.bf16.mxu0 0
    %207 = vmatpush1.bf16.msra.mxu0 0
    %208 = vmatprep.subr.bf16.mxu0 0
    %209 = vmatpush1.bf16.msra.mxu0 0
    %210 = vmatprep.mubr.bf16.mxu0 0
    %211 = vmatmul.mubr.bf16.gmra.mrb[0].mxu0 %v173
    %v212 = vpop.f32.mrb[0].mxu0
    %v213 = vadd.f32 %v145, %v212
    %v214 = vpop.f32.mrb[0].mxu0
    %v215 = vpop.f32.mrb[0].mxu0
    %v216 = vadd.f32 %v150, %v215
    %v217 = vpop.f32.mrb[0].mxu0
    %218 = vmatprep.mubr.bf16.mxu0 0
    %219 = vmatmul.mubr.bf16.gmra.mrb[0].mxu0 %v176
    %v220 = vpop.f32.mrb[0].mxu0
    %v221 = vadd.f32 %v155, %v220
    %v222 = vpop.f32.mrb[0].mxu0
    %v223 = vpop.f32.mrb[0].mxu0
    %v224 = vadd.f32 %v160, %v223
    %v225 = vpop.f32.mrb[0].mxu0
    %226 = vdwg.mxu0
    %v227 = vmax.f32 %v213, 0.0
    %v228 = vmax.f32 %v216, 0.0
    %v229 = vmax.f32 %v221, 0.0
    %v230 = vmax.f32 %v224, 0.0
    %v231 = vpack.c.bf16 %v228, %v227
    %v232 = vpack.c.bf16 %v230, %v229
    %s233 = scalar_lea.vmem %s1, 32
    %v234 = vld [vmem:[%s233] sm:$0xf]
    %v235 = vld [vmem:[%s233 + $0x4] sm:$0xf]
    %v236 = vld [vmem:[%s233 + $0x8] sm:$0xf]
    %v237 = vld [vmem:[%s233 + $0xc] sm:$0xf]
    %s238 = scalar_lea.vmem %s2, 64
    %v239 = vld [vmem:[%s238] sm:$0xff]
    %v240 = vld [vmem:[%s238 + $0x8] sm:$0xff]
    %v241 = vld [vmem:[%s238 + $0x10] sm:$0xff]
    %v242 = vld [vmem:[%s238 + $0x18] sm:$0xff]
    %244 = vset.pattern.permute.xlu0 0
    %245 = vperm.xlu0 %244, %v239
    %v246 = vpop.permute.xlu0 %245
    %249 = vset.pattern.permute.xlu0 0
    %250 = vperm.xlu0 %249, %v240
    %v251 = vpop.permute.xlu0 %250
    %254 = vset.pattern.permute.xlu0 0
    %255 = vperm.xlu0 %254, %v241
    %v256 = vpop.permute.xlu0 %255
    %259 = vset.pattern.permute.xlu0 0
    %260 = vperm.xlu0 %259, %v242
    %v261 = vpop.permute.xlu0 %260
    %v267 = vunpack.c.l.b16 %v234
    %v268 = vunpack.c.l.b16 %v235
    %v269 = vunpack.c.l.b16 %v236
    %v270 = vunpack.c.l.b16 %v237
    %v271 = vpack.c.b16 %v268, %v267
    %v272 = vpack.c.b16 %v270, %v269
    %v274 = vsel %vm70, %v271, 0
    %v277 = vsel %vm70, %v272, 0
    %279 = vmatprep.subr.bf16.mxu0 0
    %280 = vmatpush1.bf16.msra.mxu0 %v231
    %281 = vmatprep.subr.bf16.mxu0 0
    %282 = vmatpush1.bf16.msra.mxu0 %v232
    %283 = vmatprep.subr.bf16.mxu0 0
    %284 = vmatpush1.bf16.msra.mxu0 0
    %285 = vmatprep.subr.bf16.mxu0 0
    %286 = vmatpush1.bf16.msra.mxu0 0
    %287 = vmatprep.subr.bf16.mxu0 0
    %288 = vmatpush1.bf16.msra.mxu0 0
    %289 = vmatprep.subr.bf16.mxu0 0
    %290 = vmatpush1.bf16.msra.mxu0 0
    %291 = vmatprep.subr.bf16.mxu0 0
    %292 = vmatpush1.bf16.msra.mxu0 0
    %293 = vmatprep.subr.bf16.mxu0 0
    %294 = vmatpush1.bf16.msra.mxu0 0
    %295 = vmatprep.subr.bf16.mxu0 0
    %296 = vmatpush1.bf16.msra.mxu0 0
    %297 = vmatprep.subr.bf16.mxu0 0
    %298 = vmatpush1.bf16.msra.mxu0 0
    %299 = vmatprep.subr.bf16.mxu0 0
    %300 = vmatpush1.bf16.msra.mxu0 0
    %301 = vmatprep.subr.bf16.mxu0 0
    %302 = vmatpush1.bf16.msra.mxu0 0
    %303 = vmatprep.subr.bf16.mxu0 0
    %304 = vmatpush1.bf16.msra.mxu0 0
    %305 = vmatprep.subr.bf16.mxu0 0
    %306 = vmatpush1.bf16.msra.mxu0 0
    %307 = vmatprep.subr.bf16.mxu0 0
    %308 = vmatpush1.bf16.msra.mxu0 0
    %309 = vmatprep.subr.bf16.mxu0 0
    %310 = vmatpush1.bf16.msra.mxu0 0
    %311 = vmatprep.mubr.bf16.mxu0 0
    %312 = vmatmul.mubr.bf16.gmra.mrb[0].mxu0 %v274
    %v313 = vpop.f32.mrb[0].mxu0
    %v314 = vadd.f32 %v246, %v313
    %v315 = vpop.f32.mrb[0].mxu0
    %v316 = vpop.f32.mrb[0].mxu0
    %v317 = vadd.f32 %v251, %v316
    %v318 = vpop.f32.mrb[0].mxu0
    %319 = vmatprep.mubr.bf16.mxu0 0
    %320 = vmatmul.mubr.bf16.gmra.mrb[0].mxu0 %v277
    %v321 = vpop.f32.mrb[0].mxu0
    %v322 = vadd.f32 %v256, %v321
    %v323 = vpop.f32.mrb[0].mxu0
    %v324 = vpop.f32.mrb[0].mxu0
    %v325 = vadd.f32 %v261, %v324
    %v326 = vpop.f32.mrb[0].mxu0
    %327 = vdwg.mxu0
    %v328 = vmax.f32 %v314, 0.0
    %v329 = vmax.f32 %v317, 0.0
    %v330 = vmax.f32 %v322, 0.0
    %v331 = vmax.f32 %v325, 0.0
    %v332 = vpack.c.bf16 %v329, %v328
    %v333 = vpack.c.bf16 %v331, %v330
    %s334 = scalar_lea.vmem %s1, 48
    %v335 = vld [vmem:[%s334] sm:$0xf]
    %v336 = vld [vmem:[%s334 + $0x4] sm:$0xf]
    %v337 = vld [vmem:[%s334 + $0x8] sm:$0xf]
    %v338 = vld [vmem:[%s334 + $0xc] sm:$0xf]
    %s339 = scalar_lea.vmem %s2, 96
    %v340 = vld [vmem:[%s339] sm:$0xff]
    %v341 = vld [vmem:[%s339 + $0x8] sm:$0xff]
    %v342 = vld [vmem:[%s339 + $0x10] sm:$0xff]
    %v343 = vld [vmem:[%s339 + $0x18] sm:$0xff]
    %345 = vset.pattern.permute.xlu0 0
    %346 = vperm.xlu0 %345, %v340
    %v347 = vpop.permute.xlu0 %346
    %350 = vset.pattern.permute.xlu0 0
    %351 = vperm.xlu0 %350, %v341
    %v352 = vpop.permute.xlu0 %351
    %355 = vset.pattern.permute.xlu0 0
    %356 = vperm.xlu0 %355, %v342
    %v357 = vpop.permute.xlu0 %356
    %360 = vset.pattern.permute.xlu0 0
    %361 = vperm.xlu0 %360, %v343
    %v362 = vpop.permute.xlu0 %361
    %v368 = vunpack.c.l.b16 %v335
    %v369 = vunpack.c.l.b16 %v336
    %v370 = vunpack.c.l.b16 %v337
    %v371 = vunpack.c.l.b16 %v338
    %v372 = vpack.c.b16 %v369, %v368
    %v373 = vpack.c.b16 %v371, %v370
    %v375 = vsel %vm70, %v372, 0
    %v378 = vsel %vm70, %v373, 0
    %380 = vmatprep.subr.bf16.mxu0 0
    %381 = vmatpush1.bf16.msra.mxu0 %v332
    %382 = vmatprep.subr.bf16.mxu0 0
    %383 = vmatpush1.bf16.msra.mxu0 %v333
    %384 = vmatprep.subr.bf16.mxu0 0
    %385 = vmatpush1.bf16.msra.mxu0 0
    %386 = vmatprep.subr.bf16.mxu0 0
    %387 = vmatpush1.bf16.msra.mxu0 0
    %388 = vmatprep.subr.bf16.mxu0 0
    %389 = vmatpush1.bf16.msra.mxu0 0
    %390 = vmatprep.subr.bf16.mxu0 0
    %391 = vmatpush1.bf16.msra.mxu0 0
    %392 = vmatprep.subr.bf16.mxu0 0
    %393 = vmatpush1.bf16.msra.mxu0 0
    %394 = vmatprep.subr.bf16.mxu0 0
    %395 = vmatpush1.bf16.msra.mxu0 0
    %396 = vmatprep.subr.bf16.mxu0 0
    %397 = vmatpush1.bf16.msra.mxu0 0
    %398 = vmatprep.subr.bf16.mxu0 0
    %399 = vmatpush1.bf16.msra.mxu0 0
    %400 = vmatprep.subr.bf16.mxu0 0
    %401 = vmatpush1.bf16.msra.mxu0 0
    %402 = vmatprep.subr.bf16.mxu0 0
    %403 = vmatpush1.bf16.msra.mxu0 0
    %404 = vmatprep.subr.bf16.mxu0 0
    %405 = vmatpush1.bf16.msra.mxu0 0
    %406 = vmatprep.subr.bf16.mxu0 0
    %407 = vmatpush1.bf16.msra.mxu0 0
    %408 = vmatprep.subr.bf16.mxu0 0
    %409 = vmatpush1.bf16.msra.mxu0 0
    %410 = vmatprep.subr.bf16.mxu0 0
    %411 = vmatpush1.bf16.msra.mxu0 0
    %412 = vmatprep.mubr.bf16.mxu0 0
    %413 = vmatmul.mubr.bf16.gmra.mrb[0].mxu0 %v375
    %v414 = vpop.f32.mrb[0].mxu0
    %v415 = vadd.f32 %v347, %v414
    %v416 = vpop.f32.mrb[0].mxu0
    %v417 = vpop.f32.mrb[0].mxu0
    %v418 = vadd.f32 %v352, %v417
    %v419 = vpop.f32.mrb[0].mxu0
    %420 = vmatprep.mubr.bf16.mxu0 0
    %421 = vmatmul.mubr.bf16.gmra.mrb[0].mxu0 %v378
    %v422 = vpop.f32.mrb[0].mxu0
    %v423 = vadd.f32 %v357, %v422
    %v424 = vpop.f32.mrb[0].mxu0
    %v425 = vpop.f32.mrb[0].mxu0
    %v426 = vadd.f32 %v362, %v425
    %v427 = vpop.f32.mrb[0].mxu0
    %428 = vdwg.mxu0
    %v429 = vmax.f32 %v415, 0.0
    %v430 = vmax.f32 %v418, 0.0
    %v431 = vmax.f32 %v423, 0.0
    %v432 = vmax.f32 %v426, 0.0
    %v433 = vpack.c.bf16 %v430, %v429
    %v434 = vpack.c.bf16 %v432, %v431
    %s435 = scalar_lea.vmem %s1, 64
    %v436 = vld [vmem:[%s435] sm:$0xf]
    %v437 = vld [vmem:[%s435 + $0x4] sm:$0xf]
    %v438 = vld [vmem:[%s435 + $0x8] sm:$0xf]
    %v439 = vld [vmem:[%s435 + $0xc] sm:$0xf]
    %s440 = scalar_lea.vmem %s2, 128
    %v441 = vld [vmem:[%s440] sm:$0xff]
    %v442 = vld [vmem:[%s440 + $0x8] sm:$0xff]
    %v443 = vld [vmem:[%s440 + $0x10] sm:$0xff]
    %v444 = vld [vmem:[%s440 + $0x18] sm:$0xff]
    %446 = vset.pattern.permute.xlu0 0
    %447 = vperm.xlu0 %446, %v441
    %v448 = vpop.permute.xlu0 %447
    %451 = vset.pattern.permute.xlu0 0
    %452 = vperm.xlu0 %451, %v442
    %v453 = vpop.permute.xlu0 %452
    %456 = vset.pattern.permute.xlu0 0
    %457 = vperm.xlu0 %456, %v443
    %v458 = vpop.permute.xlu0 %457
    %461 = vset.pattern.permute.xlu0 0
    %462 = vperm.xlu0 %461, %v444
    %v463 = vpop.permute.xlu0 %462
    %v469 = vunpack.c.l.b16 %v436
    %v470 = vunpack.c.l.b16 %v437
    %v471 = vunpack.c.l.b16 %v438
    %v472 = vunpack.c.l.b16 %v439
    %v473 = vpack.c.b16 %v470, %v469
    %v474 = vpack.c.b16 %v472, %v471
    %v476 = vsel %vm70, %v473, 0
    %v479 = vsel %vm70, %v474, 0
    %481 = vmatprep.subr.bf16.mxu0 0
    %482 = vmatpush1.bf16.msra.mxu0 %v433
    %483 = vmatprep.subr.bf16.mxu0 0
    %484 = vmatpush1.bf16.msra.mxu0 %v434
    %485 = vmatprep.subr.bf16.mxu0 0
    %486 = vmatpush1.bf16.msra.mxu0 0
    %487 = vmatprep.subr.bf16.mxu0 0
    %488 = vmatpush1.bf16.msra.mxu0 0
    %489 = vmatprep.subr.bf16.mxu0 0
    %490 = vmatpush1.bf16.msra.mxu0 0
    %491 = vmatprep.subr.bf16.mxu0 0
    %492 = vmatpush1.bf16.msra.mxu0 0
    %493 = vmatprep.subr.bf16.mxu0 0
    %494 = vmatpush1.bf16.msra.mxu0 0
    %495 = vmatprep.subr.bf16.mxu0 0
    %496 = vmatpush1.bf16.msra.mxu0 0
    %497 = vmatprep.subr.bf16.mxu0 0
    %498 = vmatpush1.bf16.msra.mxu0 0
    %499 = vmatprep.subr.bf16.mxu0 0
    %500 = vmatpush1.bf16.msra.mxu0 0
    %501 = vmatprep.subr.bf16.mxu0 0
    %502 = vmatpush1.bf16.msra.mxu0 0
    %503 = vmatprep.subr.bf16.mxu0 0
    %504 = vmatpush1.bf16.msra.mxu0 0
    %505 = vmatprep.subr.bf16.mxu0 0
    %506 = vmatpush1.bf16.msra.mxu0 0
    %507 = vmatprep.subr.bf16.mxu0 0
    %508 = vmatpush1.bf16.msra.mxu0 0
    %509 = vmatprep.subr.bf16.mxu0 0
    %510 = vmatpush1.bf16.msra.mxu0 0
    %511 = vmatprep.subr.bf16.mxu0 0
    %512 = vmatpush1.bf16.msra.mxu0 0
    %513 = vmatprep.mubr.bf16.mxu0 0
    %514 = vmatmul.mubr.bf16.gmra.mrb[0].mxu0 %v476
    %v515 = vpop.f32.mrb[0].mxu0
    %v516 = vadd.f32 %v448, %v515
    %v517 = vpop.f32.mrb[0].mxu0
    %v518 = vpop.f32.mrb[0].mxu0
    %v519 = vadd.f32 %v453, %v518
    %v520 = vpop.f32.mrb[0].mxu0
    %521 = vmatprep.mubr.bf16.mxu0 0
    %522 = vmatmul.mubr.bf16.gmra.mrb[0].mxu0 %v479
    %v523 = vpop.f32.mrb[0].mxu0
    %v524 = vadd.f32 %v458, %v523
    %v525 = vpop.f32.mrb[0].mxu0
    %v526 = vpop.f32.mrb[0].mxu0
    %v527 = vadd.f32 %v463, %v526
    %v528 = vpop.f32.mrb[0].mxu0
    %529 = vdwg.mxu0
    %v530 = vmax.f32 %v516, 0.0
    %v531 = vmax.f32 %v519, 0.0
    %v532 = vmax.f32 %v524, 0.0
    %v533 = vmax.f32 %v527, 0.0
    %v534 = vpack.c.bf16 %v531, %v530
    %v535 = vpack.c.bf16 %v533, %v532
    %s536 = scalar_lea.vmem %s1, 80
    %v537 = vld [vmem:[%s536] sm:$0xf]
    %v538 = vld [vmem:[%s536 + $0x4] sm:$0xf]
    %v539 = vld [vmem:[%s536 + $0x8] sm:$0xf]
    %v540 = vld [vmem:[%s536 + $0xc] sm:$0xf]
    %s541 = scalar_lea.vmem %s2, 160
    %v542 = vld [vmem:[%s541] sm:$0xff]
    %v543 = vld [vmem:[%s541 + $0x8] sm:$0xff]
    %v544 = vld [vmem:[%s541 + $0x10] sm:$0xff]
    %v545 = vld [vmem:[%s541 + $0x18] sm:$0xff]
    %547 = vset.pattern.permute.xlu0 0
    %548 = vperm.xlu0 %547, %v542
    %v549 = vpop.permute.xlu0 %548
    %552 = vset.pattern.permute.xlu0 0
    %553 = vperm.xlu0 %552, %v543
    %v554 = vpop.permute.xlu0 %553
    %557 = vset.pattern.permute.xlu0 0
    %558 = vperm.xlu0 %557, %v544
    %v559 = vpop.permute.xlu0 %558
    %562 = vset.pattern.permute.xlu0 0
    %563 = vperm.xlu0 %562, %v545
    %v564 = vpop.permute.xlu0 %563
    %v570 = vunpack.c.l.b16 %v537
    %v571 = vunpack.c.l.b16 %v538
    %v572 = vunpack.c.l.b16 %v539
    %v573 = vunpack.c.l.b16 %v540
    %v574 = vpack.c.b16 %v571, %v570
    %v575 = vpack.c.b16 %v573, %v572
    %v577 = vsel %vm70, %v574, 0
    %v580 = vsel %vm70, %v575, 0
    %582 = vmatprep.subr.bf16.mxu0 0
    %583 = vmatpush1.bf16.msra.mxu0 %v534
    %584 = vmatprep.subr.bf16.mxu0 0
    %585 = vmatpush1.bf16.msra.mxu0 %v535
    %586 = vmatprep.subr.bf16.mxu0 0
    %587 = vmatpush1.bf16.msra.mxu0 0
    %588 = vmatprep.subr.bf16.mxu0 0
    %589 = vmatpush1.bf16.msra.mxu0 0
    %590 = vmatprep.subr.bf16.mxu0 0
    %591 = vmatpush1.bf16.msra.mxu0 0
    %592 = vmatprep.subr.bf16.mxu0 0
    %593 = vmatpush1.bf16.msra.mxu0 0
    %594 = vmatprep.subr.bf16.mxu0 0
    %595 = vmatpush1.bf16.msra.mxu0 0
    %596 = vmatprep.subr.bf16.mxu0 0
    %597 = vmatpush1.bf16.msra.mxu0 0
    %598 = vmatprep.subr.bf16.mxu0 0
    %599 = vmatpush1.bf16.msra.mxu0 0
    %600 = vmatprep.subr.bf16.mxu0 0
    %601 = vmatpush1.bf16.msra.mxu0 0
    %602 = vmatprep.subr.bf16.mxu0 0
    %603 = vmatpush1.bf16.msra.mxu0 0
    %604 = vmatprep.subr.bf16.mxu0 0
    %605 = vmatpush1.bf16.msra.mxu0 0
    %606 = vmatprep.subr.bf16.mxu0 0
    %607 = vmatpush1.bf16.msra.mxu0 0
    %608 = vmatprep.subr.bf16.mxu0 0
    %609 = vmatpush1.bf16.msra.mxu0 0
    %610 = vmatprep.subr.bf16.mxu0 0
    %611 = vmatpush1.bf16.msra.mxu0 0
    %612 = vmatprep.subr.bf16.mxu0 0
    %613 = vmatpush1.bf16.msra.mxu0 0
    %614 = vmatprep.mubr.bf16.mxu0 0
    %615 = vmatmul.mubr.bf16.gmra.mrb[0].mxu0 %v577
    %v616 = vpop.f32.mrb[0].mxu0
    %v617 = vadd.f32 %v549, %v616
    %v618 = vpop.f32.mrb[0].mxu0
    %v619 = vpop.f32.mrb[0].mxu0
    %v620 = vadd.f32 %v554, %v619
    %v621 = vpop.f32.mrb[0].mxu0
    %622 = vmatprep.mubr.bf16.mxu0 0
    %623 = vmatmul.mubr.bf16.gmra.mrb[0].mxu0 %v580
    %v624 = vpop.f32.mrb[0].mxu0
    %v625 = vadd.f32 %v559, %v624
    %v626 = vpop.f32.mrb[0].mxu0
    %v627 = vpop.f32.mrb[0].mxu0
    %v628 = vadd.f32 %v564, %v627
    %v629 = vpop.f32.mrb[0].mxu0
    %630 = vdwg.mxu0
    %v631 = vmax.f32 %v617, 0.0
    %v632 = vmax.f32 %v620, 0.0
    %v633 = vmax.f32 %v625, 0.0
    %v634 = vmax.f32 %v628, 0.0
    %v635 = vpack.c.bf16 %v632, %v631
    %v636 = vpack.c.bf16 %v634, %v633
    %s637 = scalar_lea.vmem %s1, 96
    %v638 = vld [vmem:[%s637] sm:$0xf]
    %v639 = vld [vmem:[%s637 + $0x4] sm:$0xf]
    %v640 = vld [vmem:[%s637 + $0x8] sm:$0xf]
    %v641 = vld [vmem:[%s637 + $0xc] sm:$0xf]
    %s642 = scalar_lea.vmem %s2, 192
    %v643 = vld [vmem:[%s642] sm:$0xff]
    %v644 = vld [vmem:[%s642 + $0x8] sm:$0xff]
    %v645 = vld [vmem:[%s642 + $0x10] sm:$0xff]
    %v646 = vld [vmem:[%s642 + $0x18] sm:$0xff]
    %648 = vset.pattern.permute.xlu0 0
    %649 = vperm.xlu0 %648, %v643
    %v650 = vpop.permute.xlu0 %649
    %653 = vset.pattern.permute.xlu0 0
    %654 = vperm.xlu0 %653, %v644
    %v655 = vpop.permute.xlu0 %654
    %658 = vset.pattern.permute.xlu0 0
    %659 = vperm.xlu0 %658, %v645
    %v660 = vpop.permute.xlu0 %659
    %663 = vset.pattern.permute.xlu0 0
    %664 = vperm.xlu0 %663, %v646
    %v665 = vpop.permute.xlu0 %664
    %v671 = vunpack.c.l.b16 %v638
    %v672 = vunpack.c.l.b16 %v639
    %v673 = vunpack.c.l.b16 %v640
    %v674 = vunpack.c.l.b16 %v641
    %v675 = vpack.c.b16 %v672, %v671
    %v676 = vpack.c.b16 %v674, %v673
    %v678 = vsel %vm70, %v675, 0
    %v681 = vsel %vm70, %v676, 0
    %683 = vmatprep.subr.bf16.mxu0 0
    %684 = vmatpush1.bf16.msra.mxu0 %v635
    %685 = vmatprep.subr.bf16.mxu0 0
    %686 = vmatpush1.bf16.msra.mxu0 %v636
    %687 = vmatprep.subr.bf16.mxu0 0
    %688 = vmatpush1.bf16.msra.mxu0 0
    %689 = vmatprep.subr.bf16.mxu0 0
    %690 = vmatpush1.bf16.msra.mxu0 0
    %691 = vmatprep.subr.bf16.mxu0 0
    %692 = vmatpush1.bf16.msra.mxu0 0
    %693 = vmatprep.subr.bf16.mxu0 0
    %694 = vmatpush1.bf16.msra.mxu0 0
    %695 = vmatprep.subr.bf16.mxu0 0
    %696 = vmatpush1.bf16.msra.mxu0 0
    %697 = vmatprep.subr.bf16.mxu0 0
    %698 = vmatpush1.bf16.msra.mxu0 0
    %699 = vmatprep.subr.bf16.mxu0 0
    %700 = vmatpush1.bf16.msra.mxu0 0
    %701 = vmatprep.subr.bf16.mxu0 0
    %702 = vmatpush1.bf16.msra.mxu0 0
    %703 = vmatprep.subr.bf16.mxu0 0
    %704 = vmatpush1.bf16.msra.mxu0 0
    %705 = vmatprep.subr.bf16.mxu0 0
    %706 = vmatpush1.bf16.msra.mxu0 0
    %707 = vmatprep.subr.bf16.mxu0 0
    %708 = vmatpush1.bf16.msra.mxu0 0
    %709 = vmatprep.subr.bf16.mxu0 0
    %710 = vmatpush1.bf16.msra.mxu0 0
    %711 = vmatprep.subr.bf16.mxu0 0
    %712 = vmatpush1.bf16.msra.mxu0 0
    %713 = vmatprep.subr.bf16.mxu0 0
    %714 = vmatpush1.bf16.msra.mxu0 0
    %715 = vmatprep.mubr.bf16.mxu0 0
    %716 = vmatmul.mubr.bf16.gmra.mrb[0].mxu0 %v678
    %v717 = vpop.f32.mrb[0].mxu0
    %v718 = vadd.f32 %v650, %v717
    %v719 = vpop.f32.mrb[0].mxu0
    %v720 = vpop.f32.mrb[0].mxu0
    %v721 = vadd.f32 %v655, %v720
    %v722 = vpop.f32.mrb[0].mxu0
    %723 = vmatprep.mubr.bf16.mxu0 0
    %724 = vmatmul.mubr.bf16.gmra.mrb[0].mxu0 %v681
    %v725 = vpop.f32.mrb[0].mxu0
    %v726 = vadd.f32 %v660, %v725
    %v727 = vpop.f32.mrb[0].mxu0
    %v728 = vpop.f32.mrb[0].mxu0
    %v729 = vadd.f32 %v665, %v728
    %v730 = vpop.f32.mrb[0].mxu0
    %731 = vdwg.mxu0
    %v732 = vmax.f32 %v718, 0.0
    %v733 = vmax.f32 %v721, 0.0
    %v734 = vmax.f32 %v726, 0.0
    %v735 = vmax.f32 %v729, 0.0
    %v736 = vpack.c.bf16 %v733, %v732
    %v737 = vpack.c.bf16 %v735, %v734
    %s738 = scalar_lea.vmem %s1, 112
    %v739 = vld [vmem:[%s738] sm:$0xf]
    %v740 = vld [vmem:[%s738 + $0x4] sm:$0xf]
    %v741 = vld [vmem:[%s738 + $0x8] sm:$0xf]
    %v742 = vld [vmem:[%s738 + $0xc] sm:$0xf]
    %s743 = scalar_lea.vmem %s2, 224
    %v744 = vld [vmem:[%s743] sm:$0xff]
    %v745 = vld [vmem:[%s743 + $0x8] sm:$0xff]
    %v746 = vld [vmem:[%s743 + $0x10] sm:$0xff]
    %v747 = vld [vmem:[%s743 + $0x18] sm:$0xff]
    %749 = vset.pattern.permute.xlu0 0
    %750 = vperm.xlu0 %749, %v744
    %v751 = vpop.permute.xlu0 %750
    %754 = vset.pattern.permute.xlu0 0
    %755 = vperm.xlu0 %754, %v745
    %v756 = vpop.permute.xlu0 %755
    %758 = vset.pattern.permute.xlu0 0
    %759 = vperm.xlu0 %758, %v746
    %v760 = vpop.permute.xlu0 %759
    %762 = vset.pattern.permute.xlu0 0
    %763 = vperm.xlu0 %762, %v747
    %v764 = vpop.permute.xlu0 %763
    %v769 = vunpack.c.l.b16 %v739
    %v770 = vunpack.c.l.b16 %v740
    %v771 = vunpack.c.l.b16 %v741
    %v772 = vunpack.c.l.b16 %v742
    %v773 = vpack.c.b16 %v770, %v769
    %v774 = vpack.c.b16 %v772, %v771
    %v776 = vsel %vm70, %v773, 0
    %v779 = vsel %vm70, %v774, 0
    %781 = vmatprep.subr.bf16.mxu0 0
    %782 = vmatpush1.bf16.msra.mxu0 %v736
    %783 = vmatprep.subr.bf16.mxu0 0
    %784 = vmatpush1.bf16.msra.mxu0 %v737
    %785 = vmatprep.subr.bf16.mxu0 0
    %786 = vmatpush1.bf16.msra.mxu0 0
    %787 = vmatprep.subr.bf16.mxu0 0
    %788 = vmatpush1.bf16.msra.mxu0 0
    %789 = vmatprep.subr.bf16.mxu0 0
    %790 = vmatpush1.bf16.msra.mxu0 0
    %791 = vmatprep.subr.bf16.mxu0 0
    %792 = vmatpush1.bf16.msra.mxu0 0
    %793 = vmatprep.subr.bf16.mxu0 0
    %794 = vmatpush1.bf16.msra.mxu0 0
    %795 = vmatprep.subr.bf16.mxu0 0
    %796 = vmatpush1.bf16.msra.mxu0 0
    %797 = vmatprep.subr.bf16.mxu0 0
    %798 = vmatpush1.bf16.msra.mxu0 0
    %799 = vmatprep.subr.bf16.mxu0 0
    %800 = vmatpush1.bf16.msra.mxu0 0
    %801 = vmatprep.subr.bf16.mxu0 0
    %802 = vmatpush1.bf16.msra.mxu0 0
    %803 = vmatprep.subr.bf16.mxu0 0
    %804 = vmatpush1.bf16.msra.mxu0 0
    %805 = vmatprep.subr.bf16.mxu0 0
    %806 = vmatpush1.bf16.msra.mxu0 0
    %807 = vmatprep.subr.bf16.mxu0 0
    %808 = vmatpush1.bf16.msra.mxu0 0
    %809 = vmatprep.subr.bf16.mxu0 0
    %810 = vmatpush1.bf16.msra.mxu0 0
    %811 = vmatprep.subr.bf16.mxu0 0
    %812 = vmatpush1.bf16.msra.mxu0 0
    %813 = vmatprep.mubr.bf16.mxu0 0
    %814 = vmatmul.mubr.bf16.gmra.mrb[0].mxu0 %v776
    %v815 = vpop.f32.mrb[0].mxu0
    %v816 = vadd.f32 %v751, %v815
    %v817 = vpop.f32.mrb[0].mxu0
    %v818 = vpop.f32.mrb[0].mxu0
    %v819 = vpop.f32.mrb[0].mxu0
    %820 = vmatprep.mubr.bf16.mxu0 0
    %821 = vmatmul.mubr.bf16.gmra.mrb[0].mxu0 %v779
    %v822 = vpop.f32.mrb[0].mxu0
    %v823 = vpop.f32.mrb[0].mxu0
    %v824 = vpop.f32.mrb[0].mxu0
    %v825 = vpop.f32.mrb[0].mxu0
    %826 = vdwg.mxu0
    %827 = vst [vmem:[#allocation2] sm:$0xff] %v816
    // Predicated region
    $region14: #{tpu_custom_call.1} parent=1 // pred_check
      _
    $region15: #{tpu_custom_call.1} parent=1 // pred_check_branch
      %829 = sbr.rel (0) target = $region17
    $region16: #{tpu_custom_call.1} parent=1 // pred_region
      %s831 = ssub.s32 128, 128
      %832 = vsyncadd [#allocation3], %s831
      %s834 = sshll.u32 [#allocation2], 4
      %s835 = int_to_ptr.vmem [resolvable:$true] %s834
      %837 = dma.vmem_to_hbm [thread:$0]  %s835, 128, %s3, [#allocation3]
    $region17: #{tpu_custom_call.1} parent=1 // pred_fallthru
      _
    // Predicated region
    $region18: #{tpu_custom_call.1} parent=1 // pred_check
      _
    $region19: #{tpu_custom_call.1} parent=1 // pred_check_branch
      %839 = sbr.rel (0) target = $region21
    $region20: #{tpu_custom_call.1} parent=1 // pred_region
      %840 = dma.done [#allocation3], 128
    $region21: #{tpu_custom_call.1} parent=1 // pred_fallthru
      _
    %841 = vsyncpa [#allocation3], 1

</llo_original>
